<compile_context>
chip_gen: v7x
topology: tpu7x:2x2x1
jax: 0.10.0
libtpu: 0.0.40
codegen_flags: <defaults>
</compile_context>

<pallas_src>
import jax
import jax.numpy as jnp
from jax.experimental import pallas as pl
from jax.experimental.pallas import tpu as pltpu


def _decision_kernel(d_ref, x_ref, o_ref):
    # d_ref: (1,) scalar parameter in SMEM
    # x_ref/o_ref: (TR, 128) tiles in VMEM
    d = d_ref[0]
    e = jnp.exp(x_ref[...] - d)                     # exp(-(d-x)) == exp(x-d)
    o_ref[...] = pl.reciprocal(1.0 + e, approx=True)  # EUP vrcp, off the VALU


def differentiable_decision_node(x, decision, *, tile_rows=1024):
    """y = sigmoid(decision - x), broadcasting the scalar `decision` over x.

    x: f32 array of any shape; decision: f32 array of shape (1,).
    """
    orig_shape = x.shape
    orig_dtype = x.dtype
    total = x.size
    lanes = 128

    # Pad the flattened tensor so it forms full (rows, 128) vregs with rows a
    # multiple of 8 (sublane) and of the row tile (so every block is full-size).
    rows = pl.cdiv(total, lanes)
    rows = max(8, ((rows + 7) // 8) * 8)
    tr = min(tile_rows, rows)
    rows = ((rows + tr - 1) // tr) * tr
    padded = rows * lanes

    x_flat = x.reshape(-1)
    if padded != total:
        x_flat = jnp.pad(x_flat, (0, padded - total))
    x2d = x_flat.reshape(rows, lanes)

    out2d = pl.pallas_call(
        _decision_kernel,
        out_shape=jax.ShapeDtypeStruct((rows, lanes), orig_dtype),
        grid=(rows // tr,),
        in_specs=[
            pl.BlockSpec(memory_space=pltpu.SMEM),          # scalar param
            pl.BlockSpec((tr, lanes), lambda i: (i, 0)),     # x row tile
        ],
        out_specs=pl.BlockSpec((tr, lanes), lambda i: (i, 0)),
        compiler_params=pltpu.CompilerParams(
            dimension_semantics=("parallel",),               # shard rows on v7x
        ),
    )(decision, x2d)

    out_flat = out2d.reshape(-1)
    if padded != total:
        out_flat = out_flat[:total]
    return out_flat.reshape(orig_shape)


if __name__ == "__main__":
    key = jax.random.PRNGKey(0)
    k_param, k_x = jax.random.split(key)

    # Deterministic "parameter" (torch.randn(1) equivalent).
    decision = jax.random.normal(k_param, (1,), dtype=jnp.float32)

    # Input consistent with an NCHW conv-style tensor.
    x = jax.random.normal(k_x, (2, 4, 16, 16), dtype=jnp.float32)

    y = differentiable_decision_node(x, decision)
    y = jax.block_until_ready(y)

    # Reference check in plain JAX (tolerance loosened for approx reciprocal).
    y_ref = jax.nn.sigmoid(decision[0] - x)
    assert y.shape == x.shape
    assert jnp.allclose(y, y_ref, atol=2e-3, rtol=2e-3)

    print("KERNEL_OK")
</pallas_src>

<mosaic_0001>
module attributes {stable_mosaic.version = 11 : i64} {
  func.func @_decision_kernel(%arg0: i32, %arg1: memref<1xf32, #tpu.memory_space<smem>>, %arg2: memref<16x128xf32, #tpu.memory_space<vmem>>, %arg3: memref<16x128xf32, #tpu.memory_space<vmem>>) attributes {dimension_semantics = [#tpu.dimension_semantics<parallel>], iteration_bounds = array<i64: 1>, scalar_prefetch = 0 : i64, scratch_operands = 0 : i64, tpu.core_type = #tpu.core_type<tc>, window_params = [{transform_indices = @transform_0, window_bounds = array<i64: 1>}, {transform_indices = @transform_1, window_bounds = array<i64: 16, 128>}, {transform_indices = @transform_2, window_bounds = array<i64: 16, 128>}]} {
    %c0 = arith.constant 0 : index
    %0 = memref.load %arg1[%c0] : memref<1xf32, #tpu.memory_space<smem>>
    %c0_0 = arith.constant 0 : index
    %c0_1 = arith.constant 0 : index
    %1 = vector.load %arg2[%c0_0, %c0_1] : memref<16x128xf32, #tpu.memory_space<vmem>>, vector<16x128xf32>
    %2 = vector.broadcast %0 : f32 to vector<16x128xf32>
    %3 = arith.subf %1, %2 : vector<16x128xf32>
    %4 = math.exp %3 : vector<16x128xf32>
    %cst = arith.constant 1.000000e+00 : f32
    %5 = vector.broadcast %cst : f32 to vector<16x128xf32>
    %6 = arith.addf %5, %4 : vector<16x128xf32>
    %7 = tpu.reciprocal %6 {approx = true} : vector<16x128xf32> -> vector<16x128xf32>
    %c0_2 = arith.constant 0 : index
    %c0_3 = arith.constant 0 : index
    %8 = vector.load %arg3[%c0_2, %c0_3] : memref<16x128xf32, #tpu.memory_space<vmem>>, vector<16x128xf32>
    tpu.vector_store %arg3[%c0_2, %c0_3], %7 {strides = array<i32>} : memref<16x128xf32, #tpu.memory_space<vmem>>, vector<16x128xf32>,
    return
  }
  func.func @transform_0(%arg0: i32) -> i32 {
    %c0_i32 = arith.constant 0 : i32
    %c0_i32_0 = arith.constant 0 : i32
    return %c0_i32 : i32
  }
  func.func @transform_1(%arg0: i32) -> (i32, i32) {
    %c0_i32 = arith.constant 0 : i32
    %c0_i32_0 = arith.constant 0 : i32
    return %arg0, %c0_i32 : i32, i32
  }
  func.func @transform_2(%arg0: i32) -> (i32, i32) {
    %c0_i32 = arith.constant 0 : i32
    %c0_i32_0 = arith.constant 0 : i32
    return %arg0, %c0_i32 : i32, i32
  }
}

</mosaic_0001>

<llo_original>
// kernel: tpu_custom_call.1
$region0: #{tpu_custom_call.1}
  #allocation0 [shape = 'u32[]', space=smem, size = 0x4, offset = 0x4, fixed_abs, tag = 'smem constant byte address 0x4 - core index']
  #allocation1 [shape = 'u32[144,128]{1,0:T(1,128)}', space=vmem, size = 0x12000, scoped, tag = 'internal scratch']
  #allocation2 [shape = 'f32[1]{0:T(128)S(6)}', space=smem, size = 0x200, scoped, tag = 'scoped memory for tpu_custom_call.1']
  %s0 = inlined_call_operand.<no memory space> [shape: f32[1], index: 0, kind: input, shape index: {}]
  %s1 = inlined_call_operand.hbm [shape: f32[16,128], index: 1, kind: input, shape index: {}]
  %s2 = inlined_call_operand.hbm [shape: f32[16,128], index: 2, kind: output, shape index: {}]
  %s3 = sld [smem:[#allocation0]]
  $region22: #{tpu_custom_call.1} parent=0
    _
  %s5 = ssub.s32 1, %s3
  %s6 = scalar_select 0, %s5, %s3
  %7 = sst [smem:[#allocation2]] %s0
  $region1: #{tpu_custom_call.1} parent=0
    #allocation3 [shape = 'u8[8192]{0}', space=vmem, size = 0x2000, scoped, tag = 'input window, operand 1, single buffered']
    #allocation4 [shape = 's32[1]{0}', space=sflag, size = 0x4, scoped, tag = 'scoped memory for tpu_custom_call.1']
    #allocation5 [shape = 's32[1]{0}', space=sflag, size = 0x4, scoped, tag = 'scoped memory for tpu_custom_call.1']
    #allocation6 [shape = 'u8[8192]{0}', space=vmem, size = 0x2000, scoped, tag = 'output window, operand 0, single buffered']
    %8 = vsyncpa [#allocation4], 0
    %9 = vsyncpa [#allocation5], 0
    // Predicated region
    $region2: #{tpu_custom_call.1} parent=1 // pred_check
      _
    $region3: #{tpu_custom_call.1} parent=1 // pred_check_branch
      %11 = sbr.rel (0) target = $region5
    $region4: #{tpu_custom_call.1} parent=1 // pred_region
      _
    $region5: #{tpu_custom_call.1} parent=1 // pred_fallthru
      _
    // Predicated region
    $region6: #{tpu_custom_call.1} parent=1 // pred_check
      _
    $region7: #{tpu_custom_call.1} parent=1 // pred_check_branch
      %13 = sbr.rel (0) target = $region9
    $region8: #{tpu_custom_call.1} parent=1 // pred_region
      %s15 = ssub.s32 256, 256
      %16 = vsyncadd [#allocation4], %s15
      %s17 = sshll.u32 [#allocation3], 4
      %s18 = int_to_ptr.vmem [resolvable:$true] %s17
      %23 = dma.hbm_to_vmem [thread:$0]  %s1, 256, %s18, [#allocation4], 128, 128, 8
    $region9: #{tpu_custom_call.1} parent=1 // pred_fallthru
      _
    // Predicated region
    $region10: #{tpu_custom_call.1} parent=1 // pred_check
      _
    $region11: #{tpu_custom_call.1} parent=1 // pred_check_branch
      %25 = sbr.rel (0) target = $region13
    $region12: #{tpu_custom_call.1} parent=1 // pred_region
      %26 = dma.done [#allocation4], 256
    $region13: #{tpu_custom_call.1} parent=1 // pred_fallthru
      _
    %s27 = sld [smem:[#allocation2]]
    %v28 = vld [vmem:[#allocation3] sm:$0xff]
    %v29 = vld [vmem:[#allocation3 + $0x8] sm:$0xff]
    %v30 = vstv %s27
    %v31 = vsub.f32 %v28, %v30
    %v32 = vsub.f32 %v29, %v30
    %v33 = vmul.f32 %v31, 1.442695
    %v34 = vpow.pop %v33
    %v35 = vmul.f32 %v32, 1.442695
    %v36 = vpow.pop %v35
    %v37 = vadd.f32 %v34, 1.0
    %v38 = vadd.f32 %v36, 1.0
    %v39 = vrcp.pop %v37
    %v40 = vrcp.pop %v38
    %41 = vst [vmem:[#allocation6] sm:$0xff] %v39
    %42 = vst [vmem:[#allocation6 + $0x8] sm:$0xff] %v40
    // Predicated region
    $region14: #{tpu_custom_call.1} parent=1 // pred_check
      _
    $region15: #{tpu_custom_call.1} parent=1 // pred_check_branch
      %44 = sbr.rel (0) target = $region17
    $region16: #{tpu_custom_call.1} parent=1 // pred_region
      %s46 = ssub.s32 256, 256
      %47 = vsyncadd [#allocation5], %s46
      %s48 = sshll.u32 [#allocation6], 4
      %s49 = int_to_ptr.vmem [resolvable:$true] %s48
      %54 = dma.vmem_to_hbm [thread:$0]  %s49, 256, %s2, [#allocation5], 128, 128, 8
    $region17: #{tpu_custom_call.1} parent=1 // pred_fallthru
      _
    // Predicated region
    $region18: #{tpu_custom_call.1} parent=1 // pred_check
      _
    $region19: #{tpu_custom_call.1} parent=1 // pred_check_branch
      %56 = sbr.rel (0) target = $region21
    $region20: #{tpu_custom_call.1} parent=1 // pred_region
      %57 = dma.done [#allocation5], 256
    $region21: #{tpu_custom_call.1} parent=1 // pred_fallthru
      _
    %58 = vsyncpa [#allocation4], 1
    %59 = vsyncpa [#allocation5], 1

</llo_original>
